<compile_context>
chip_gen: v7x
topology: tpu7x:2x2x1
jax: 0.10.0
libtpu: 0.0.40
codegen_flags: <defaults>
</compile_context>

<pallas_src>
import jax
import jax.numpy as jnp
from jax.experimental import pallas as pl
from jax.experimental.pallas import tpu as pltpu


def _round_up(v, m):
    return ((v + m - 1) // m) * m


def _make_kernel(ch_pad, ce_pad, c_pad, emit_context):
    """Kernel over one batch tile. Column layout of the single matmul result:
       [ pos (ch_pad) | neg (ch_pad) | logit_exp (ch_pad) | logit (c_pad) ],
       all boundaries multiples of 128 -> aligned, copy-free slices."""

    def kernel(x_ref, w_ref, b_ref, slab_ref, pred_ref):
        x = x_ref[...]                                                     # (TB, F) bf16
        # Single MXU matmul for encoder + expanded scorer + narrow scorer.
        acc = jnp.dot(x, w_ref[...], preferred_element_type=jnp.float32)
        acc = acc + b_ref[...]                                             # (TB, N) f32

        pos = acc[:, :ch_pad]                                              # (TB, CHp)
        neg = acc[:, ch_pad:ce_pad]                                        # (TB, CHp)
        if emit_context:
            # Store the context embedding early: lane-dense unmasked store, shortens
            # the f32 live range and overlaps writeback with the mixture VPU work.
            slab_ref[:, :ce_pad] = acc[:, :ce_pad].astype(slab_ref.dtype)

        # p broadcast across each concept's H lanes comes straight from the matmul
        # (logit columns pre-repeated H times host-side) -> no extra matmul.
        p_exp = jax.nn.sigmoid(acc[:, ce_pad:ce_pad + ch_pad])             # (TB, CHp)
        mix = neg + p_exp * (pos - neg)                                    # == p*pos + (1-p)*neg
        if emit_context:
            slab_ref[:, ce_pad:] = mix.astype(slab_ref.dtype)
        else:
            slab_ref[...] = mix.astype(slab_ref.dtype)

        # Narrow (padded-to-128) per-concept scores; lane-dense f32 store.
        pred_ref[...] = jax.nn.sigmoid(acc[:, ce_pad + ch_pad:]).astype(pred_ref.dtype)

    return kernel


def _vmem_estimate(bb, feat, n_cols, slab_cols, c_pad):
    """Rough per-kernel VMEM footprint (bytes) at batch tile bb."""
    fixed = feat * n_cols * 2 + n_cols * 4            # single-buffered bf16 weights + f32 bias
    per = (2 * bb * feat * 2                          # x tile (bf16, double-buffered)
           + 2 * bb * slab_cols * 2                   # [emb|mix] slab (bf16, double-buffered)
           + 2 * bb * c_pad * 4                       # c_pred tile (f32, double-buffered)
           + bb * n_cols * 4)                         # f32 matmul accumulator
    return fixed + per


def _pick_block_b(batch, feat, n_cols, slab_cols, c_pad, vmem_cap):
    """Largest batch tile fitting ~80% of VMEM while keeping >= 2 grid steps
    (both v7x TensorCores get work) whenever the batch allows."""
    budget = int(0.8 * vmem_cap)
    for bb in (256, 128, 64, 32, 16, 8):
        if 2 * bb <= batch and _vmem_estimate(bb, feat, n_cols, slab_cols, c_pad) <= budget:
            return bb
    return 8


def mix_concept_embedding_bottleneck(x, w_enc_t, b_enc, w_sc, b_sc, *,
                                     n_concepts, emb_size, block_b=None,
                                     emit_context=True):
    """Pallas forward of MixConceptEmbeddingBottleneck.

    Args:
      x:        (B, F) input.
      w_enc_t:  (F, C*E) encoder weight (transposed vs. torch's (C*E, F)).
      b_enc:    (C*E,) encoder bias.
      w_sc:     (E,) scorer weight (torch Linear(E, 1) weight squeezed).
      b_sc:     (1,) scorer bias.
      emit_context: if False, skip computing/writing the 'context' (c_emb) output,
        cutting ~2/3 of HBM writeback traffic; 'context' is returned as None.
    """
    B, F = x.shape
    C, E = n_concepts, emb_size
    assert E % 2 == 0, "c_emb_size must be even for concept_embedding_mixture"
    H = E // 2
    CH = C * H

    f32, bf16 = jnp.float32, jnp.bfloat16
    w_enc_t = w_enc_t.astype(f32)
    b_enc = b_enc.astype(f32)
    w_sc = w_sc.astype(f32)
    b_sc = b_sc.astype(f32)

    # --- padded, 128-aligned column layout ---------------------------------------
    CH_pad = _round_up(CH, 128)
    CE_pad = 2 * CH_pad                         # [pos | neg], split boundary at 128-multiple
    C_pad = _round_up(C, 128)
    N_total = CE_pad + CH_pad + C_pad           # [pos | neg | logit_exp | logit]
    SLAB = (CE_pad + CH_pad) if emit_context else CH_pad

    # --- wrapper-side weight folding (O(F*C*E), done once; no kron) ---------------
    w3 = w_enc_t.reshape(F, C, E)
    b2 = b_enc.reshape(C, E)
    w_pos = w3[:, :, :H].reshape(F, CH)                      # pos halves, concept-major
    w_neg = w3[:, :, H:].reshape(F, CH)                      # neg halves, concept-major
    b_pos = b2[:, :H].reshape(CH)
    b_neg = b2[:, H:].reshape(CH)
    # Folded per-concept scorer: logit = x @ w_logit + b_logit (== scorer(encoder(x))).
    w_logit = (w3 * w_sc).sum(-1)                            # (F, C)
    b_logit = (b2 * w_sc).sum(-1) + b_sc[0]                  # (C,)
    # Score broadcast folded into the weight: each logit column repeated H times.
    w_lexp = jnp.repeat(w_logit, H, axis=1)                  # (F, CH)
    b_lexp = jnp.repeat(b_logit, H)                          # (CH,)

    def pad_cols(w, n):
        return jnp.pad(w, ((0, 0), (0, n - w.shape[1])))

    def pad_vec(b, n):
        return jnp.pad(b, (0, n - b.shape[0]))

    w_big = jnp.concatenate(
        [pad_cols(w_pos, CH_pad), pad_cols(w_neg, CH_pad),
         pad_cols(w_lexp, CH_pad), pad_cols(w_logit, C_pad)], axis=1).astype(bf16)
    b_big = jnp.concatenate(
        [pad_vec(b_pos, CH_pad), pad_vec(b_neg, CH_pad),
         pad_vec(b_lexp, CH_pad), pad_vec(b_logit, C_pad)]).reshape(1, N_total)  # f32

    # --- generation-aware VMEM budget ---------------------------------------------
    try:
        vmem_cap = int(pltpu.get_tpu_info().vmem_capacity_bytes)
    except Exception:
        vmem_cap = 64 * 1024 * 1024            # conservative v7x per-TC fallback

    if block_b is None:
        block_b = _pick_block_b(B, F, N_total, SLAB, C_pad, vmem_cap)
    block_b = max(8, (block_b // 8) * 8)

    B_pad = pl.cdiv(B, block_b) * block_b
    x_p = x.astype(bf16)
    if B_pad != B:
        x_p = jnp.pad(x_p, ((0, B_pad - B), (0, 0)))
    grid = (B_pad // block_b,)

    est = _vmem_estimate(block_b, F, N_total, SLAB, C_pad)
    vmem_limit = int(min(vmem_cap, max(int(0.8 * vmem_cap), est + (2 << 20))))

    kernel = _make_kernel(CH_pad, CE_pad, C_pad, emit_context)
    out_shape = (
        jax.ShapeDtypeStruct((B_pad, SLAB), bf16),     # [pos|neg|mix] (or [mix]) slab
        jax.ShapeDtypeStruct((B_pad, C_pad), f32),     # c_pred, padded to 128 lanes
    )
    out_specs = (
        pl.BlockSpec((block_b, SLAB), lambda i: (i, 0)),
        pl.BlockSpec((block_b, C_pad), lambda i: (i, 0)),
    )
    compiler_params = pltpu.CompilerParams(
        dimension_semantics=("parallel",),
        vmem_limit_bytes=vmem_limit,
    )

    def run(single_buffer_consts):
        def const_spec(shape):
            if single_buffer_consts:
                # Constant index_map (0,0) -> single VMEM buffer is enough; halves
                # resident weight VMEM (matters on v7x's 64 MiB/TC).
                return pl.BlockSpec(shape, lambda i: (0, 0),
                                    pipeline_mode=pl.Buffered(1))
            return pl.BlockSpec(shape, lambda i: (0, 0))

        return pl.pallas_call(
            kernel,
            out_shape=out_shape,
            grid=grid,
            in_specs=[
                pl.BlockSpec((block_b, F), lambda i: (i, 0)),   # x tile (bf16)
                const_spec((F, N_total)),                        # concatenated bf16 weights
                const_spec((1, N_total)),                        # concatenated f32 bias row
            ],
            out_specs=out_specs,
            compiler_params=compiler_params,
        )(x_p, w_big, b_big)

    try:
        slab, pred = run(single_buffer_consts=True)
    except Exception:
        # TODO(synk): pipeline_mode=pl.Buffered(1) not supported by this jax version;
        # fall back to default double-buffering of the constant weight blocks.
        slab, pred = run(single_buffer_consts=False)

    slab = slab[:B]
    c_pred = pred[:B, :C]

    if emit_context:
        pos = slab[:, :CH].astype(f32).reshape(B, C, H)
        neg = slab[:, CH_pad:CH_pad + CH].astype(f32).reshape(B, C, H)
        c_emb = jnp.concatenate([pos, neg], axis=-1)           # (B, C, E)
        mix_off = CE_pad
    else:
        c_emb = None
        mix_off = 0
    c_mix = slab[:, mix_off:mix_off + CH].astype(f32).reshape(B, C, H)

    c_int = c_pred  # intervene(c_pred, None, None) == c_pred
    # TODO(synk): intervention path (c_true / intervention_idxs) and ConceptTensor
    # name metadata have no tensor-compute content and are not ported.
    return {'next': c_mix, 'c_pred': c_pred, 'c_int': c_int, 'emb': None, 'context': c_emb}


if __name__ == "__main__":
    # Small shapes consistent with the module: batch=16, in_features=32,
    # out_concept_dimensions = {1: 4 concepts, 2: 16 embedding size}.
    B, F, C, E = 16, 32, 4, 16
    H = E // 2

    key = jax.random.PRNGKey(0)
    kx, kw1, kb1, kw2, kb2 = jax.random.split(key, 5)
    x = jax.random.normal(kx, (B, F), dtype=jnp.float32)

    # Deterministic PyTorch-style nn.Linear init: U(-1/sqrt(fan_in), 1/sqrt(fan_in)).
    bound1 = 1.0 / (F ** 0.5)
    w_enc_t = jax.random.uniform(kw1, (F, C * E), jnp.float32, -bound1, bound1)
    b_enc = jax.random.uniform(kb1, (C * E,), jnp.float32, -bound1, bound1)
    bound2 = 1.0 / (E ** 0.5)
    w_sc = jax.random.uniform(kw2, (E,), jnp.float32, -bound2, bound2)
    b_sc = jax.random.uniform(kb2, (1,), jnp.float32, -bound2, bound2)

    out = mix_concept_embedding_bottleneck(
        x, w_enc_t, b_enc, w_sc, b_sc, n_concepts=C, emb_size=E)
    jax.block_until_ready(out['next'])

    # Pure-JAX f32 reference (kernel uses bf16 MXU inputs / bf16 emb+mix outputs).
    emb_r = (x @ w_enc_t + b_enc).reshape(B, C, E)
    logit_r = jnp.einsum('bce,e->bc', emb_r, w_sc) + b_sc[0]
    p_r = jax.nn.sigmoid(logit_r)
    mix_r = p_r[..., None] * emb_r[:, :, :H] + (1.0 - p_r[..., None]) * emb_r[:, :, H:]

    assert out['context'].shape == (B, C, E)
    assert out['c_pred'].shape == (B, C)
    assert out['next'].shape == (B, C, H)
    assert jnp.allclose(out['context'], emb_r, atol=2e-2, rtol=2e-2)
    assert jnp.allclose(out['c_pred'], p_r, atol=2e-2, rtol=2e-2)
    assert jnp.allclose(out['c_int'], p_r, atol=2e-2, rtol=2e-2)
    assert jnp.allclose(out['next'], mix_r, atol=2e-2, rtol=2e-2)
    assert out['emb'] is None

    # Context-skip fast path (cuts the dominant emb writeback traffic).
    out2 = mix_concept_embedding_bottleneck(
        x, w_enc_t, b_enc, w_sc, b_sc, n_concepts=C, emb_size=E, emit_context=False)
    jax.block_until_ready(out2['next'])
    assert out2['context'] is None
    assert jnp.allclose(out2['next'], mix_r, atol=2e-2, rtol=2e-2)
    assert jnp.allclose(out2['c_pred'], p_r, atol=2e-2, rtol=2e-2)

    print("KERNEL_OK")
</pallas_src>

<mosaic_0001>
module attributes {stable_mosaic.version = 11 : i64} {
  func.func @kernel(%arg0: i32, %arg1: memref<8x32xbf16, #tpu.memory_space<vmem>>, %arg2: memref<32x512xbf16, #tpu.memory_space<vmem>>, %arg3: memref<1x512xf32, #tpu.memory_space<vmem>>, %arg4: memref<8x384xbf16, #tpu.memory_space<vmem>>, %arg5: memref<8x128xf32, #tpu.memory_space<vmem>>) attributes {dimension_semantics = [#tpu.dimension_semantics<parallel>], iteration_bounds = array<i64: 2>, scalar_prefetch = 0 : i64, scratch_operands = 0 : i64, tpu.core_type = #tpu.core_type<tc>, window_params = [{transform_indices = @transform_0, window_bounds = array<i64: 8, 32>}, {pipeline_mode = #tpu.pipeline_mode<synchronous>, transform_indices = @transform_1, window_bounds = array<i64: 32, 512>}, {pipeline_mode = #tpu.pipeline_mode<synchronous>, transform_indices = @transform_2, window_bounds = array<i64: 1, 512>}, {transform_indices = @transform_3, window_bounds = array<i64: 8, 384>}, {transform_indices = @transform_4, window_bounds = array<i64: 8, 128>}]} {
    %c0 = arith.constant 0 : index
    %c0_0 = arith.constant 0 : index
    %0 = vector.load %arg1[%c0, %c0_0] : memref<8x32xbf16, #tpu.memory_space<vmem>>, vector<8x32xbf16>
    %c0_1 = arith.constant 0 : index
    %c0_2 = arith.constant 0 : index
    %1 = vector.load %arg2[%c0_1, %c0_2] : memref<32x512xbf16, #tpu.memory_space<vmem>>, vector<32x512xbf16>
    %cst = arith.constant dense<0.000000e+00> : vector<8x512xf32>
    %2 = tpu.matmul %0, %1, %cst {dimension_numbers = #tpu.dot_dimension_numbers<[1], [0], [0], [1], [0, 0, 1, 1], [], []>} : vector<8x32xbf16>, vector<32x512xbf16>, vector<8x512xf32> -> vector<8x512xf32>
    %c0_3 = arith.constant 0 : index
    %c0_4 = arith.constant 0 : index
    %3 = vector.load %arg3[%c0_3, %c0_4] : memref<1x512xf32, #tpu.memory_space<vmem>>, vector<1x512xf32>
    %4 = vector.broadcast %3 : vector<1x512xf32> to vector<8x512xf32>
    %5 = arith.addf %2, %4 : vector<8x512xf32>
    %6 = vector.extract_strided_slice %5 {offsets = [0, 0], sizes = [8, 128], strides = [1, 1]} : vector<8x512xf32> to vector<8x128xf32>
    %7 = vector.extract_strided_slice %5 {offsets = [0, 128], sizes = [8, 128], strides = [1, 1]} : vector<8x512xf32> to vector<8x128xf32>
    %8 = vector.extract_strided_slice %5 {offsets = [0, 0], sizes = [8, 256], strides = [1, 1]} : vector<8x512xf32> to vector<8x256xf32>
    %9 = arith.truncf %8 : vector<8x256xf32> to vector<8x256xbf16>
    %c0_5 = arith.constant 0 : index
    %c0_6 = arith.constant 0 : index
    %10 = vector.load %arg4[%c0_5, %c0_6] : memref<8x384xbf16, #tpu.memory_space<vmem>>, vector<8x256xbf16>
    tpu.vector_store %arg4[%c0_5, %c0_6], %9 {strides = array<i32>} : memref<8x384xbf16, #tpu.memory_space<vmem>>, vector<8x256xbf16>,
    %11 = vector.extract_strided_slice %5 {offsets = [0, 256], sizes = [8, 128], strides = [1, 1]} : vector<8x512xf32> to vector<8x128xf32>
    %12 = arith.negf %11 : vector<8x128xf32>
    %13 = math.exp %12 : vector<8x128xf32>
    %cst_7 = arith.constant 1.000000e+00 : f32
    %14 = vector.broadcast %cst_7 : f32 to vector<8x128xf32>
    %15 = arith.addf %14, %13 : vector<8x128xf32>
    %16 = arith.divf %14, %15 : vector<8x128xf32>
    %17 = arith.subf %6, %7 : vector<8x128xf32>
    %18 = arith.mulf %16, %17 : vector<8x128xf32>
    %19 = arith.addf %7, %18 : vector<8x128xf32>
    %20 = arith.truncf %19 : vector<8x128xf32> to vector<8x128xbf16>
    %c0_8 = arith.constant 0 : index
    %c256 = arith.constant 256 : index
    %21 = vector.load %arg4[%c0_8, %c256] : memref<8x384xbf16, #tpu.memory_space<vmem>>, vector<8x128xbf16>
    tpu.vector_store %arg4[%c0_8, %c256], %20 {strides = array<i32>} : memref<8x384xbf16, #tpu.memory_space<vmem>>, vector<8x128xbf16>,
    %22 = vector.extract_strided_slice %5 {offsets = [0, 384], sizes = [8, 128], strides = [1, 1]} : vector<8x512xf32> to vector<8x128xf32>
    %23 = arith.negf %22 : vector<8x128xf32>
    %24 = math.exp %23 : vector<8x128xf32>
    %cst_9 = arith.constant 1.000000e+00 : f32
    %25 = vector.broadcast %cst_9 : f32 to vector<8x128xf32>
    %26 = arith.addf %25, %24 : vector<8x128xf32>
    %27 = arith.divf %25, %26 : vector<8x128xf32>
    %c0_10 = arith.constant 0 : index
    %c0_11 = arith.constant 0 : index
    %28 = vector.load %arg5[%c0_10, %c0_11] : memref<8x128xf32, #tpu.memory_space<vmem>>, vector<8x128xf32>
    tpu.vector_store %arg5[%c0_10, %c0_11], %27 {strides = array<i32>} : memref<8x128xf32, #tpu.memory_space<vmem>>, vector<8x128xf32>,
    return
  }
  func.func @transform_0(%arg0: i32) -> (i32, i32) {
    %c0_i32 = arith.constant 0 : i32
    %c0_i32_0 = arith.constant 0 : i32
    return %arg0, %c0_i32 : i32, i32
  }
  func.func @transform_1(%arg0: i32) -> (i32, i32) {
    %c0_i32 = arith.constant 0 : i32
    %c0_i32_0 = arith.constant 0 : i32
    %c0_i32_1 = arith.constant 0 : i32
    return %c0_i32, %c0_i32_0 : i32, i32
  }
  func.func @transform_2(%arg0: i32) -> (i32, i32) {
    %c0_i32 = arith.constant 0 : i32
    %c0_i32_0 = arith.constant 0 : i32
    %c0_i32_1 = arith.constant 0 : i32
    return %c0_i32, %c0_i32_0 : i32, i32
  }
  func.func @transform_3(%arg0: i32) -> (i32, i32) {
    %c0_i32 = arith.constant 0 : i32
    %c0_i32_0 = arith.constant 0 : i32
    return %arg0, %c0_i32 : i32, i32
  }
  func.func @transform_4(%arg0: i32) -> (i32, i32) {
    %c0_i32 = arith.constant 0 : i32
    %c0_i32_0 = arith.constant 0 : i32
    return %arg0, %c0_i32 : i32, i32
  }
}

module attributes {stable_mosaic.version = 11 : i64} {
  func.func @kernel(%arg0: i32, %arg1: memref<8x32xbf16, #tpu.memory_space<vmem>>, %arg2: memref<32x512xbf16, #tpu.memory_space<vmem>>, %arg3: memref<1x512xf32, #tpu.memory_space<vmem>>, %arg4: memref<8x384xbf16, #tpu.memory_space<vmem>>, %arg5: memref<8x128xf32, #tpu.memory_space<vmem>>) attributes {dimension_semantics = [#tpu.dimension_semantics<parallel>], iteration_bounds = array<i64: 2>, scalar_prefetch = 0 : i64, scratch_operands = 0 : i64, tpu.core_type = #tpu.core_type<tc>, window_params = [{transform_indices = @transform_0, window_bounds = array<i64: 8, 32>}, {pipeline_mode = #tpu.pipeline_mode<synchronous>, transform_indices = @transform_1, window_bounds = array<i64: 32, 512>}, {pipeline_mode = #tpu.pipeline_mode<synchronous>, transform_indices = @transform_2, window_bounds = array<i64: 1, 512>}, {transform_indices = @transform_3, window_bounds = array<i64: 8, 384>}, {transform_indices = @transform_4, window_bounds = array<i64: 8, 128>}]} {
    %c0 = arith.constant 0 : index
    %c0_0 = arith.constant 0 : index
    %0 = vector.load %arg1[%c0, %c0_0] : memref<8x32xbf16, #tpu.memory_space<vmem>>, vector<8x32xbf16>
    %c0_1 = arith.constant 0 : index
    %c0_2 = arith.constant 0 : index
    %1 = vector.load %arg2[%c0_1, %c0_2] : memref<32x512xbf16, #tpu.memory_space<vmem>>, vector<32x512xbf16>
    %cst = arith.constant dense<0.000000e+00> : vector<8x512xf32>
    %2 = tpu.matmul %0, %1, %cst {dimension_numbers = #tpu.dot_dimension_numbers<[1], [0], [0], [1], [0, 0, 1, 1], [], []>} : vector<8x32xbf16>, vector<32x512xbf16>, vector<8x512xf32> -> vector<8x512xf32>
    %c0_3 = arith.constant 0 : index
    %c0_4 = arith.constant 0 : index
    %3 = vector.load %arg3[%c0_3, %c0_4] : memref<1x512xf32, #tpu.memory_space<vmem>>, vector<1x512xf32>
    %4 = vector.broadcast %3 : vector<1x512xf32> to vector<8x512xf32>
    %5 = arith.addf %2, %4 : vector<8x512xf32>
    %6 = vector.extract_strided_slice %5 {offsets = [0, 0], sizes = [8, 128], strides = [1, 1]} : vector<8x512xf32> to vector<8x128xf32>
    %7 = vector.extract_strided_slice %5 {offsets = [0, 128], sizes = [8, 128], strides = [1, 1]} : vector<8x512xf32> to vector<8x128xf32>
    %8 = vector.extract_strided_slice %5 {offsets = [0, 0], sizes = [8, 256], strides = [1, 1]} : vector<8x512xf32> to vector<8x256xf32>
    %9 = arith.truncf %8 : vector<8x256xf32> to vector<8x256xbf16>
    %c0_5 = arith.constant 0 : index
    %c0_6 = arith.constant 0 : index
    %10 = vector.load %arg4[%c0_5, %c0_6] : memref<8x384xbf16, #tpu.memory_space<vmem>>, vector<8x256xbf16>
    tpu.vector_store %arg4[%c0_5, %c0_6], %9 {strides = array<i32>} : memref<8x384xbf16, #tpu.memory_space<vmem>>, vector<8x256xbf16>,
    %11 = vector.extract_strided_slice %5 {offsets = [0, 256], sizes = [8, 128], strides = [1, 1]} : vector<8x512xf32> to vector<8x128xf32>
    %12 = arith.negf %11 : vector<8x128xf32>
    %13 = math.exp %12 : vector<8x128xf32>
    %cst_7 = arith.constant 1.000000e+00 : f32
    %14 = vector.broadcast %cst_7 : f32 to vector<8x128xf32>
    %15 = arith.addf %14, %13 : vector<8x128xf32>
    %16 = arith.divf %14, %15 : vector<8x128xf32>
    %17 = arith.subf %6, %7 : vector<8x128xf32>
    %18 = arith.mulf %16, %17 : vector<8x128xf32>
    %19 = arith.addf %7, %18 : vector<8x128xf32>
    %20 = arith.truncf %19 : vector<8x128xf32> to vector<8x128xbf16>
    %c0_8 = arith.constant 0 : index
    %c256 = arith.constant 256 : index
    %21 = vector.load %arg4[%c0_8, %c256] : memref<8x384xbf16, #tpu.memory_space<vmem>>, vector<8x128xbf16>
    tpu.vector_store %arg4[%c0_8, %c256], %20 {strides = array<i32>} : memref<8x384xbf16, #tpu.memory_space<vmem>>, vector<8x128xbf16>,
    %22 = vector.extract_strided_slice %5 {offsets = [0, 384], sizes = [8, 128], strides = [1, 1]} : vector<8x512xf32> to vector<8x128xf32>
    %23 = arith.negf %22 : vector<8x128xf32>
    %24 = math.exp %23 : vector<8x128xf32>
    %cst_9 = arith.constant 1.000000e+00 : f32
    %25 = vector.broadcast %cst_9 : f32 to vector<8x128xf32>
    %26 = arith.addf %25, %24 : vector<8x128xf32>
    %27 = arith.divf %25, %26 : vector<8x128xf32>
    %c0_10 = arith.constant 0 : index
    %c0_11 = arith.constant 0 : index
    %28 = vector.load %arg5[%c0_10, %c0_11] : memref<8x128xf32, #tpu.memory_space<vmem>>, vector<8x128xf32>
    tpu.vector_store %arg5[%c0_10, %c0_11], %27 {strides = array<i32>} : memref<8x128xf32, #tpu.memory_space<vmem>>, vector<8x128xf32>,
    return
  }
  func.func @transform_0(%arg0: i32) -> (i32, i32) {
    %c0_i32 = arith.constant 0 : i32
    %c0_i32_0 = arith.constant 0 : i32
    return %arg0, %c0_i32 : i32, i32
  }
  func.func @transform_1(%arg0: i32) -> (i32, i32) {
    %c0_i32 = arith.constant 0 : i32
    %c0_i32_0 = arith.constant 0 : i32
    %c0_i32_1 = arith.constant 0 : i32
    return %c0_i32, %c0_i32_0 : i32, i32
  }
  func.func @transform_2(%arg0: i32) -> (i32, i32) {
    %c0_i32 = arith.constant 0 : i32
    %c0_i32_0 = arith.constant 0 : i32
    %c0_i32_1 = arith.constant 0 : i32
    return %c0_i32, %c0_i32_0 : i32, i32
  }
  func.func @transform_3(%arg0: i32) -> (i32, i32) {
    %c0_i32 = arith.constant 0 : i32
    %c0_i32_0 = arith.constant 0 : i32
    return %arg0, %c0_i32 : i32, i32
  }
  func.func @transform_4(%arg0: i32) -> (i32, i32) {
    %c0_i32 = arith.constant 0 : i32
    %c0_i32_0 = arith.constant 0 : i32
    return %arg0, %c0_i32 : i32, i32
  }
}

</mosaic_0001>

<llo_original>
// kernel: tpu_custom_call.1
$region0: #{tpu_custom_call.1}
  #allocation0 [shape = 'u32[]', space=smem, size = 0x4, offset = 0x4, fixed_abs, tag = 'smem constant byte address 0x4 - core index']
  #allocation1 [shape = 'u32[144,128]{1,0:T(1,128)}', space=vmem, size = 0x12000, scoped, tag = 'internal scratch']
  %s0 = inlined_call_operand.hbm [shape: bf16[16,32], index: 0, kind: input, shape index: {}]
  %s1 = inlined_call_operand.hbm [shape: bf16[32,512], index: 1, kind: input, shape index: {}]
  %s2 = inlined_call_operand.vmem [shape: f32[1,512], index: 2, kind: input, shape index: {}]
  %s3 = inlined_call_operand.hbm [shape: bf16[16,384], index: 3, kind: output, shape index: {0}]
  %s4 = inlined_call_operand.hbm [shape: f32[16,128], index: 4, kind: output, shape index: {1}]
  %5 = xla_tuple %s3, %s4
  %s6 = sld [smem:[#allocation0]]
  $region61: #{tpu_custom_call.1} parent=0
    _
  %s8 = ssub.s32 1, %s6
  %s9 = scalar_select 0, %s8, %s6
  $region1: #{tpu_custom_call.1} parent=0
    #allocation2 [shape = 'u8[4096]{0}', space=vmem, size = 0x1000, scoped, tag = 'input window, operand 0']
    #allocation3 [shape = 's32[2]{0}', space=sflag, size = 0x8, scoped, tag = 'scoped memory for tpu_custom_call.1']
    #allocation4 [shape = 's32[2]{0}', space=sflag, size = 0x8, scoped, tag = 'scoped memory for tpu_custom_call.1']
    #allocation5 [shape = 'u8[32768]{0}', space=vmem, size = 0x8000, scoped, tag = 'input window, operand 1, single buffered']
    #allocation6 [shape = 's32[1]{0}', space=sflag, size = 0x4, scoped, tag = 'scoped memory for tpu_custom_call.1']
    #allocation7 [shape = 'u8[12288]{0}', space=vmem, size = 0x3000, scoped, tag = 'output window, operand 0']
    #allocation8 [shape = 'u8[8192]{0}', space=vmem, size = 0x2000, scoped, tag = 'output window, operand 1']
    #allocation9 [shape = 's32[2]{0}', space=sflag, size = 0x8, scoped, tag = 'scoped memory for tpu_custom_call.1']
    %10 = vsyncpa [#allocation3], 0
    %s11 = scalar_lea.sflag [#allocation3], 1
    %12 = vsyncpa %s11, 0
    %13 = vsyncpa [#allocation6], 0
    %14 = vsyncpa [#allocation4], 0
    %s15 = scalar_lea.sflag [#allocation4], 1
    %16 = vsyncpa %s15, 0
    %17 = vsyncpa [#allocation9], 0
    %s18 = scalar_lea.sflag [#allocation9], 1
    %19 = vsyncpa %s18, 0
    loop: start=0, step=1, limit=4
    $region2: #{tpu_custom_call.1} parent=1 // loop_pre_header
      _
    $region3: #{tpu_custom_call.1} parent=1 // loop_header
      %s21 = sphi 0, %s25
      %p22 = scmp.ge.s32.totalorder %s21, 4
      %s31 = sphi 0, %s33
      %s34 = sphi 0, %s31
      %s35 = sphi 0, %s34
      %s51 = sphi 0, %s35
      %s55 = sphi 0, %s55
      %s57 = sphi 0, %s55
      %s58 = sphi 0, %s57
      %s72 = sphi 0, %s58
      %s76 = sphi 0, %s76
      %s78 = sphi 0, %s76
      %s79 = sphi 0, %s78
      %s93 = sphi 0, %s79
      %s99 = sphi 0, %s101
      %s102 = sphi 0, %s99
      %s103 = sphi 0, %s102
      %s119 = sphi 0, %s103
      %s125 = sphi 0, %s127
      %s128 = sphi 0, %s125
      %s129 = sphi 0, %s128
      %s145 = sphi 0, %s129
    $region4: #{tpu_custom_call.1} parent=1 // loop_header_branch
      %24 = sbr.rel (%p22) target = $region8
    $region5: #{tpu_custom_call.1} parent=1 // loop_body
      %s26 = ssub.s32 %s21, 1
      %s27 = ssub.s32 %s21, 2
      %s28 = sadd.s32 %s21, 1
      %s29 = ssub.s32 %s21, %s28
      %p30 = scmp.eq.s32.totalorder %s29, 0
      %s32 = sadd.s32 %s31, 1
      %s33 = scalar_select %p30, %s31, %s32
      %p36 = pneg %p30
      %p37 = scmp.eq.s32.totalorder %s21, 1
      %p38 = por %p36, %p37
      %p39 = scmp.ne.s32.totalorder %s31, %s34
      %p40 = scmp.eq.s32.totalorder %s21, 0
      %p41 = por %p39, %p40
      %p42 = scmp.ne.s32.totalorder %s31, %s34
      %p43 = scmp.eq.s32.totalorder %s26, 1
      %p44 = por %p42, %p43
      %p45 = scmp.ne.s32.totalorder %s34, %s35
      %p46 = scmp.eq.s32.totalorder %s26, 0
      %p47 = por %p45, %p46
      %p48 = scmp.ne.s32.totalorder %s34, %s35
      %p49 = scmp.eq.s32.totalorder %s27, 1
      %p50 = por %p48, %p49
      %p52 = scmp.ne.s32.totalorder %s35, %s51
      %p53 = scmp.eq.s32.totalorder %s27, 0
      %p54 = por %p52, %p53
      %s56 = sadd.s32 %s55, 1
      %p59 = scmp.eq.s32.totalorder %s21, 1
      %p60 = scmp.ne.s32.totalorder %s55, %s57
      %p61 = scmp.eq.s32.totalorder %s21, 0
      %p62 = por %p60, %p61
      %p63 = scmp.ne.s32.totalorder %s55, %s57
      %p64 = scmp.eq.s32.totalorder %s26, 1
      %p65 = por %p63, %p64
      %p66 = scmp.ne.s32.totalorder %s57, %s58
      %p67 = scmp.eq.s32.totalorder %s26, 0
      %p68 = por %p66, %p67
      %p69 = scmp.ne.s32.totalorder %s57, %s58
      %p70 = scmp.eq.s32.totalorder %s27, 1
      %p71 = por %p69, %p70
      %p73 = scmp.ne.s32.totalorder %s58, %s72
      %p74 = scmp.eq.s32.totalorder %s27, 0
      %p75 = por %p73, %p74
      %s77 = sadd.s32 %s76, 1
      %p80 = scmp.eq.s32.totalorder %s21, 1
      %p81 = scmp.ne.s32.totalorder %s76, %s78
      %p82 = scmp.eq.s32.totalorder %s21, 0
      %p83 = por %p81, %p82
      %p84 = scmp.ne.s32.totalorder %s76, %s78
      %p85 = scmp.eq.s32.totalorder %s26, 1
      %p86 = por %p84, %p85
      %p87 = scmp.ne.s32.totalorder %s78, %s79
      %p88 = scmp.eq.s32.totalorder %s26, 0
      %p89 = por %p87, %p88
      %p90 = scmp.ne.s32.totalorder %s78, %s79
      %p91 = scmp.eq.s32.totalorder %s27, 1
      %p92 = por %p90, %p91
      %p94 = scmp.ne.s32.totalorder %s79, %s93
      %p95 = scmp.eq.s32.totalorder %s27, 0
      %p96 = por %p94, %p95
      %s97 = ssub.s32 %s21, %s28
      %p98 = scmp.eq.s32.totalorder %s97, 0
      %s100 = sadd.s32 %s99, 1
      %s101 = scalar_select %p98, %s99, %s100
      %p104 = pneg %p98
      %p105 = scmp.eq.s32.totalorder %s21, 1
      %p106 = por %p104, %p105
      %p107 = scmp.ne.s32.totalorder %s99, %s102
      %p108 = scmp.eq.s32.totalorder %s21, 0
      %p109 = por %p107, %p108
      %p110 = scmp.ne.s32.totalorder %s99, %s102
      %p111 = scmp.eq.s32.totalorder %s26, 1
      %p112 = por %p110, %p111
      %p113 = scmp.ne.s32.totalorder %s102, %s103
      %p114 = scmp.eq.s32.totalorder %s26, 0
      %p115 = por %p113, %p114
      %p116 = scmp.ne.s32.totalorder %s102, %s103
      %p117 = scmp.eq.s32.totalorder %s27, 1
      %p118 = por %p116, %p117
      %p120 = scmp.ne.s32.totalorder %s103, %s119
      %p121 = scmp.eq.s32.totalorder %s27, 0
      %p122 = por %p120, %p121
      %s123 = ssub.s32 %s21, %s28
      %p124 = scmp.eq.s32.totalorder %s123, 0
      %s126 = sadd.s32 %s125, 1
      %s127 = scalar_select %p124, %s125, %s126
      %p130 = pneg %p124
      %p131 = scmp.eq.s32.totalorder %s21, 1
      %p132 = por %p130, %p131
      %p133 = scmp.ne.s32.totalorder %s125, %s128
      %p134 = scmp.eq.s32.totalorder %s21, 0
      %p135 = por %p133, %p134
      %p136 = scmp.ne.s32.totalorder %s125, %s128
      %p137 = scmp.eq.s32.totalorder %s26, 1
      %p138 = por %p136, %p137
      %p139 = scmp.ne.s32.totalorder %s128, %s129
      %p140 = scmp.eq.s32.totalorder %s26, 0
      %p141 = por %p139, %p140
      %p142 = scmp.ne.s32.totalorder %s128, %s129
      %p143 = scmp.eq.s32.totalorder %s27, 1
      %p144 = por %p142, %p143
      %p146 = scmp.ne.s32.totalorder %s129, %s145
      %p147 = scmp.eq.s32.totalorder %s27, 0
      %p148 = por %p146, %p147
      %p149 = scmp.le.s32.totalorder 1, %s21
      %p150 = scmp.lt.s32.totalorder %s21, 3
      %p151 = pnand %p149, %p150
      %p152 = pneg %p151
      // Predicated region
      $region9: #{tpu_custom_call.1} parent=5 // pred_check
        _
      $region10: #{tpu_custom_call.1} parent=5 // pred_check_branch
        %154 = sbr.rel (%p151) target = $region12
      $region11: #{tpu_custom_call.1} parent=5 // pred_region
        %s155 = ssub.s32 %s21, 1
        // Predicated region
        $region13: #{tpu_custom_call.1} parent=11 // pred_check
          %p156 = pneg %p68
        $region14: #{tpu_custom_call.1} parent=11 // pred_check_branch
          %158 = sbr.rel (%p156) target = $region16
        $region15: #{tpu_custom_call.1} parent=11 // pred_region
          %s160 = ssub.s32 1024, 1024
          %161 = vsyncadd [#allocation6], %s160
          %s162 = sshll.u32 [#allocation5], 4
          %s163 = int_to_ptr.vmem [resolvable:$true] %s162
          %168 = dma.hbm_to_vmem [thread:$0]  %s1, 1024, %s163, [#allocation6], 256, 256, 16
        $region16: #{tpu_custom_call.1} parent=11 // pred_fallthru
          _
        // Predicated region
        $region17: #{tpu_custom_call.1} parent=11 // pred_check
          %p169 = pneg %p89
        $region18: #{tpu_custom_call.1} parent=11 // pred_check_branch
          %171 = sbr.rel (%p169) target = $region20
        $region19: #{tpu_custom_call.1} parent=11 // pred_region
          _
        $region20: #{tpu_custom_call.1} parent=11 // pred_fallthru
          _
      $region12: #{tpu_custom_call.1} parent=5 // pred_fallthru
        _
      %p172 = scmp.lt.s32.totalorder %s21, 2
      // Predicated region
      $region21: #{tpu_custom_call.1} parent=5 // pred_check
        %p173 = pneg %p172
      $region22: #{tpu_custom_call.1} parent=5 // pred_check_branch
        %175 = sbr.rel (%p173) target = $region24
      $region23: #{tpu_custom_call.1} parent=5 // pred_region
        // Predicated region
        $region25: #{tpu_custom_call.1} parent=23 // pred_check
          %p176 = pneg %p41
        $region26: #{tpu_custom_call.1} parent=23 // pred_check_branch
          %178 = sbr.rel (%p176) target = $region28
        $region27: #{tpu_custom_call.1} parent=23 // pred_region
          %s179 = sand.u32 %s31, 1
          %s180 = scalar_lea.sflag [#allocation3], %s179
          %s181 = sand.u32 %s31, 1
          %s182 = smul.addr %s181, 4
          %s183 = scalar_lea.vmem [#allocation2], %s182
          %s185 = ssub.s32 64, 64
          %186 = vsyncadd %s180, %s185
          %s187 = smul.addr %s21, 64
          %s188 = scalar_lea.hbm %s0, %s187
          %s190 = sshll.u32 %s183, 4
          %s191 = int_to_ptr.vmem [resolvable:$true] %s190
          %193 = dma.hbm_to_vmem [thread:$0]  %s188, 64, %s191, %s180
        $region28: #{tpu_custom_call.1} parent=23 // pred_fallthru
          _
      $region24: #{tpu_custom_call.1} parent=5 // pred_fallthru
        _
      %p194 = scmp.le.s32.totalorder 1, %s21
      %p195 = scmp.lt.s32.totalorder %s21, 3
      %p196 = pnand %p194, %p195
      %p197 = pneg %p196
      // Predicated region
      $region29: #{tpu_custom_call.1} parent=5 // pred_check
        _
      $region30: #{tpu_custom_call.1} parent=5 // pred_check_branch
        %199 = sbr.rel (%p196) target = $region32
      $region31: #{tpu_custom_call.1} parent=5 // pred_region
        %s200 = ssub.s32 %s21, 1
        %s201 = sand.u32 %s34, 1
        %s202 = scalar_lea.sflag [#allocation3], %s201
        %s203 = sand.u32 %s34, 1
        %s204 = smul.addr %s203, 4
        %s205 = scalar_lea.vmem [#allocation2], %s204
        // Predicated region
        $region33: #{tpu_custom_call.1} parent=31 // pred_check
          %p206 = pneg %p47
        $region34: #{tpu_custom_call.1} parent=31 // pred_check_branch
          %208 = sbr.rel (%p206) target = $region36
        $region35: #{tpu_custom_call.1} parent=31 // pred_region
          %209 = dma.done %s202, 64
        $region36: #{tpu_custom_call.1} parent=31 // pred_fallthru
          _
        // Predicated region
        $region37: #{tpu_custom_call.1} parent=31 // pred_check
          %p210 = pneg %p68
        $region38: #{tpu_custom_call.1} parent=31 // pred_check_branch
          %212 = sbr.rel (%p210) target = $region40
        $region39: #{tpu_custom_call.1} parent=31 // pred_region
          %213 = dma.done [#allocation6], 1024
        $region40: #{tpu_custom_call.1} parent=31 // pred_fallthru
          _
        %s214 = sand.u32 %s34, 1
        %s215 = scalar_lea.sflag [#allocation3], %s214
        %s216 = sand.u32 %s34, 1
        %s217 = smul.addr %s216, 4
        %s218 = scalar_lea.vmem [#allocation2], %s217
        %p219 = pneg %p47
        %p220 = pneg %p44
        %p221 = pneg %p68
        %p222 = pneg %p65
        %p223 = pneg %p89
        %p224 = pneg %p86
        %p225 = pneg %p115
        %p226 = pneg %p112
        %s227 = sand.u32 %s102, 1
        %s228 = scalar_lea.sflag [#allocation4], %s227
        %s229 = sand.u32 %s102, 1
        %s230 = smul.addr %s229, 12
        %s231 = scalar_lea.vmem [#allocation7], %s230
        %p232 = pneg %p141
        %p233 = pneg %p138
        %s234 = sand.u32 %s128, 1
        %s235 = scalar_lea.sflag [#allocation9], %s234
        %s236 = sand.u32 %s128, 1
        %s237 = smul.addr %s236, 8
        %s238 = scalar_lea.vmem [#allocation8], %s237
        %v240 = vld [vmem:[%s205] sm:$0xf]
        %v241 = vld [vmem:[#allocation5] sm:$0xff]
        %v242 = vld [vmem:[#allocation5 + $0x8] sm:$0xff]
        %v243 = vld [vmem:[#allocation5 + $0x10] sm:$0xff]
        %v244 = vld [vmem:[#allocation5 + $0x18] sm:$0xff]
        %v245 = vld [vmem:[#allocation5 + $0x20] sm:$0xff]
        %v246 = vld [vmem:[#allocation5 + $0x28] sm:$0xff]
        %v247 = vld [vmem:[#allocation5 + $0x30] sm:$0xff]
        %v248 = vld [vmem:[#allocation5 + $0x38] sm:$0xff]
        %v249 = vld [vmem:[%s2] sm:$0xf]
        %v251 = vlaneseq
        %v252 = vshrl.u32 %v251, 7
        %v253 = vsub.s32 0, %v252
        %v254 = vrot.slane %v249, %v253
        %v255 = vlaneseq
        %v256 = vshrl.u32 %v255, 7
        %v257 = vsub.s32 1, %v256
        %v258 = vrot.slane %v249, %v257
        %v259 = vlaneseq
        %v260 = vshrl.u32 %v259, 7
        %v261 = vsub.s32 2, %v260
        %v262 = vrot.slane %v249, %v261
        %v263 = vlaneseq
        %v264 = vshrl.u32 %v263, 7
        %v265 = vsub.s32 3, %v264
        %v266 = vrot.slane %v249, %v265
        %v279 = vunpack.c.l.b16 %v241
        %v280 = vunpack.c.h.b16 %v241
        %v281 = vunpack.c.l.b16 %v242
        %v282 = vunpack.c.h.b16 %v242
        %v283 = vunpack.c.l.b16 %v243
        %v284 = vunpack.c.h.b16 %v243
        %v285 = vunpack.c.l.b16 %v244
        %v286 = vunpack.c.h.b16 %v244
        %v287 = vunpack.c.l.b16 %v245
        %v288 = vunpack.c.h.b16 %v245
        %v289 = vunpack.c.l.b16 %v246
        %v290 = vunpack.c.h.b16 %v246
        %v291 = vunpack.c.l.b16 %v247
        %v292 = vunpack.c.h.b16 %v247
        %v293 = vunpack.c.l.b16 %v248
        %v294 = vunpack.c.h.b16 %v248
        %v295 = vpack.c.b16 %v283, %v279
        %v296 = vpack.c.b16 %v284, %v280
        %v297 = vpack.c.b16 %v285, %v281
        %v298 = vpack.c.b16 %v286, %v282
        %v299 = vpack.c.b16 %v291, %v287
        %v300 = vpack.c.b16 %v292, %v288
        %v301 = vpack.c.b16 %v293, %v289
        %v302 = vpack.c.b16 %v294, %v290
        %vm311 = vcmask 261120
        %v313 = vsel %vm311, %v240, 0
        %315 = vmatprep.subr.bf16.mxu0 %v296
        %316 = vmatpush1.bf16.msra.mxu0 %v295
        %317 = vmatprep.subr.bf16.mxu0 %v300
        %318 = vmatpush1.bf16.msra.mxu0 %v299
        %319 = vmatprep.subr.bf16.mxu0 0
        %320 = vmatpush1.bf16.msra.mxu0 0
        %321 = vmatprep.subr.bf16.mxu0 0
        %322 = vmatpush1.bf16.msra.mxu0 0
        %323 = vmatprep.subr.bf16.mxu0 0
        %324 = vmatpush1.bf16.msra.mxu0 0
        %325 = vmatprep.subr.bf16.mxu0 0
        %326 = vmatpush1.bf16.msra.mxu0 0
        %327 = vmatprep.subr.bf16.mxu0 0
        %328 = vmatpush1.bf16.msra.mxu0 0
        %329 = vmatprep.subr.bf16.mxu0 0
        %330 = vmatpush1.bf16.msra.mxu0 0
        %331 = vmatprep.subr.bf16.mxu0 0
        %332 = vmatpush1.bf16.msra.mxu0 0
        %333 = vmatprep.subr.bf16.mxu0 0
        %334 = vmatpush1.bf16.msra.mxu0 0
        %335 = vmatprep.subr.bf16.mxu0 0
        %336 = vmatpush1.bf16.msra.mxu0 0
        %337 = vmatprep.subr.bf16.mxu0 0
        %338 = vmatpush1.bf16.msra.mxu0 0
        %339 = vmatprep.subr.bf16.mxu0 0
        %340 = vmatpush1.bf16.msra.mxu0 0
        %341 = vmatprep.subr.bf16.mxu0 0
        %342 = vmatpush1.bf16.msra.mxu0 0
        %343 = vmatprep.subr.bf16.mxu0 0
        %344 = vmatpush1.bf16.msra.mxu0 0
        %345 = vmatprep.subr.bf16.mxu0 0
        %346 = vmatpush1.bf16.msra.mxu0 0
        %347 = vmatprep.mubr.bf16.mxu0 0
        %348 = vmatmul.mubr.bf16.gmra.mrb[0].mxu0 %v313
        %v349 = vpop.f32.mrb[0].mxu0
        %v350 = vadd.f32 %v254, %v349
        %v351 = vpop.f32.mrb[0].mxu0
        %v352 = vadd.f32 %v258, %v351
        %v353 = vpop.f32.mrb[0].mxu0
        %v354 = vpop.f32.mrb[0].mxu0
        %355 = vdwg.mxu0
        %356 = vmatprep.subr.bf16.mxu0 %v298
        %357 = vmatpush1.bf16.msra.mxu0 %v297
        %358 = vmatprep.subr.bf16.mxu0 %v302
        %359 = vmatpush1.bf16.msra.mxu0 %v301
        %360 = vmatprep.subr.bf16.mxu0 0
        %361 = vmatpush1.bf16.msra.mxu0 0
        %362 = vmatprep.subr.bf16.mxu0 0
        %363 = vmatpush1.bf16.msra.mxu0 0
        %364 = vmatprep.subr.bf16.mxu0 0
        %365 = vmatpush1.bf16.msra.mxu0 0
        %366 = vmatprep.subr.bf16.mxu0 0
        %367 = vmatpush1.bf16.msra.mxu0 0
        %368 = vmatprep.subr.bf16.mxu0 0
        %369 = vmatpush1.bf16.msra.mxu0 0
        %370 = vmatprep.subr.bf16.mxu0 0
        %371 = vmatpush1.bf16.msra.mxu0 0
        %372 = vmatprep.subr.bf16.mxu0 0
        %373 = vmatpush1.bf16.msra.mxu0 0
        %374 = vmatprep.subr.bf16.mxu0 0
        %375 = vmatpush1.bf16.msra.mxu0 0
        %376 = vmatprep.subr.bf16.mxu0 0
        %377 = vmatpush1.bf16.msra.mxu0 0
        %378 = vmatprep.subr.bf16.mxu0 0
        %379 = vmatpush1.bf16.msra.mxu0 0
        %380 = vmatprep.subr.bf16.mxu0 0
        %381 = vmatpush1.bf16.msra.mxu0 0
        %382 = vmatprep.subr.bf16.mxu0 0
        %383 = vmatpush1.bf16.msra.mxu0 0
        %384 = vmatprep.subr.bf16.mxu0 0
        %385 = vmatpush1.bf16.msra.mxu0 0
        %386 = vmatprep.subr.bf16.mxu0 0
        %387 = vmatpush1.bf16.msra.mxu0 0
        %388 = vmatprep.mubr.bf16.mxu0 0
        %389 = vmatmul.mubr.bf16.gmra.mrb[0].mxu0 %v313
        %v390 = vpop.f32.mrb[0].mxu0
        %v391 = vadd.f32 %v262, %v390
        %v392 = vpop.f32.mrb[0].mxu0
        %v393 = vadd.f32 %v266, %v392
        %v394 = vpop.f32.mrb[0].mxu0
        %v395 = vpop.f32.mrb[0].mxu0
        %396 = vdwg.mxu0
        %v397 = vpack.c.bf16 %v350, %v350
        %v398 = vpack.c.bf16 %v352, %v352
        %v401 = vunpack.c.l.b16 %v397
        %v402 = vunpack.c.l.b16 %v398
        %v403 = vpack.c.b16 %v402, %v401
        %405 = vst [vmem:[%s231] sm:$0xff] %v403
        %v406 = vxor.u32 %v391, 2147483648
        %v407 = vmul.f32 %v406, 1.442695
        %v408 = vpow.pop %v407
        %v409 = vadd.f32 %v408, 1.0
        %v410 = vrcp.pop %v409
        %v411 = vmul.f32 1.0, %v410
        %v412 = vsub.f32 %v350, %v352
        %v413 = vmul.f32 %v411, %v412
        %v414 = vadd.f32 %v352, %v413
        %v415 = vpack.c.bf16 %v414, %v414
        %416 = vst [vmem:[%s231 + $0x8] sm:$0xf] %v415
        %v417 = vxor.u32 %v393, 2147483648
        %v418 = vmul.f32 %v417, 1.442695
        %v419 = vpow.pop %v418
        %v420 = vadd.f32 %v419, 1.0
        %v421 = vrcp.pop %v420
        %v422 = vmul.f32 1.0, %v421
        %423 = vst [vmem:[%s238] sm:$0xff] %v422
        %s424 = sand.u32 %s102, 1
        %s425 = scalar_lea.sflag [#allocation4], %s424
        %s426 = sand.u32 %s102, 1
        %s427 = smul.addr %s426, 12
        %s428 = scalar_lea.vmem [#allocation7], %s427
        %s429 = sand.u32 %s128, 1
        %s430 = scalar_lea.sflag [#allocation9], %s429
        %s431 = sand.u32 %s128, 1
        %s432 = smul.addr %s431, 8
        %s433 = scalar_lea.vmem [#allocation8], %s432
        // Predicated region
        $region41: #{tpu_custom_call.1} parent=31 // pred_check
          %p434 = pneg %p112
        $region42: #{tpu_custom_call.1} parent=31 // pred_check_branch
          %436 = sbr.rel (%p434) target = $region44
        $region43: #{tpu_custom_call.1} parent=31 // pred_region
          %s438 = ssub.s32 192, 192
          %439 = vsyncadd %s425, %s438
          %s440 = smul.addr %s26, 3
          %s441 = smul.addr %s440, 64
          %s442 = scalar_lea.hbm %s3, %s441
          %s444 = sshll.u32 %s428, 4
          %s445 = int_to_ptr.vmem [resolvable:$true] %s444
          %447 = dma.vmem_to_hbm [thread:$0]  %s445, 192, %s442, %s425
        $region44: #{tpu_custom_call.1} parent=31 // pred_fallthru
          _
        // Predicated region
        $region45: #{tpu_custom_call.1} parent=31 // pred_check
          %p448 = pneg %p138
        $region46: #{tpu_custom_call.1} parent=31 // pred_check_branch
          %450 = sbr.rel (%p448) target = $region48
        $region47: #{tpu_custom_call.1} parent=31 // pred_region
          %s452 = ssub.s32 128, 128
          %453 = vsyncadd %s430, %s452
          %s454 = smul.addr %s26, 128
          %s455 = scalar_lea.hbm %s4, %s454
          %s457 = sshll.u32 %s433, 4
          %s458 = int_to_ptr.vmem [resolvable:$true] %s457
          %460 = dma.vmem_to_hbm [thread:$0]  %s458, 128, %s455, %s430
        $region48: #{tpu_custom_call.1} parent=31 // pred_fallthru
          _
      $region32: #{tpu_custom_call.1} parent=5 // pred_fallthru
        _
      %p461 = scmp.le.s32.totalorder 2, %s21
      // Predicated region
      $region49: #{tpu_custom_call.1} parent=5 // pred_check
        %p462 = pneg %p461
      $region50: #{tpu_custom_call.1} parent=5 // pred_check_branch
        %464 = sbr.rel (%p462) target = $region52
      $region51: #{tpu_custom_call.1} parent=5 // pred_region
        %s465 = ssub.s32 %s21, 2
        // Predicated region
        $region53: #{tpu_custom_call.1} parent=51 // pred_check
          %p466 = pneg %p118
        $region54: #{tpu_custom_call.1} parent=51 // pred_check_branch
          %468 = sbr.rel (%p466) target = $region56
        $region55: #{tpu_custom_call.1} parent=51 // pred_region
          %s469 = sand.u32 %s103, 1
          %s470 = scalar_lea.sflag [#allocation4], %s469
          %s471 = sand.u32 %s103, 1
          %s472 = smul.addr %s471, 12
          %s473 = scalar_lea.vmem [#allocation7], %s472
          %474 = dma.done %s470, 192
        $region56: #{tpu_custom_call.1} parent=51 // pred_fallthru
          _
        // Predicated region
        $region57: #{tpu_custom_call.1} parent=51 // pred_check
          %p475 = pneg %p144
        $region58: #{tpu_custom_call.1} parent=51 // pred_check_branch
          %477 = sbr.rel (%p475) target = $region60
        $region59: #{tpu_custom_call.1} parent=51 // pred_region
          %s478 = sand.u32 %s129, 1
          %s479 = scalar_lea.sflag [#allocation9], %s478
          %s480 = sand.u32 %s129, 1
          %s481 = smul.addr %s480, 8
          %s482 = scalar_lea.vmem [#allocation8], %s481
          %483 = dma.done %s479, 128
        $region60: #{tpu_custom_call.1} parent=51 // pred_fallthru
          _
      $region52: #{tpu_custom_call.1} parent=5 // pred_fallthru
        _
    $region6: #{tpu_custom_call.1} parent=1 // loop_footer
      %s25 = sadd.s32 1, %s21
    $region7: #{tpu_custom_call.1} parent=1 // loop_footer_branch
      %20 = sbr.rel target = $region3
    $region8: #{tpu_custom_call.1} parent=1 // loop_exit
      _
    %484 = vsyncpa [#allocation3], 1
    %s485 = scalar_lea.sflag [#allocation3], 1
    %486 = vsyncpa %s485, 1
    %487 = vsyncpa [#allocation6], 1
    %488 = vsyncpa [#allocation4], 1
    %s489 = scalar_lea.sflag [#allocation4], 1
    %490 = vsyncpa %s489, 1
    %491 = vsyncpa [#allocation9], 1
    %s492 = scalar_lea.sflag [#allocation9], 1
    %493 = vsyncpa %s492, 1

// kernel: tpu_custom_call.1
$region0: #{tpu_custom_call.1}
  #allocation0 [shape = 'u32[]', space=smem, size = 0x4, offset = 0x4, fixed_abs, tag = 'smem constant byte address 0x4 - core index']
  #allocation1 [shape = 'u32[144,128]{1,0:T(1,128)}', space=vmem, size = 0x12000, scoped, tag = 'internal scratch']
  %s0 = inlined_call_operand.hbm [shape: bf16[16,32], index: 0, kind: input, shape index: {}]
  %s1 = inlined_call_operand.hbm [shape: bf16[32,512], index: 1, kind: input, shape index: {}]
  %s2 = inlined_call_operand.vmem [shape: f32[1,512], index: 2, kind: input, shape index: {}]
  %s3 = inlined_call_operand.hbm [shape: bf16[16,384], index: 3, kind: output, shape index: {0}]
  %s4 = inlined_call_operand.hbm [shape: f32[16,128], index: 4, kind: output, shape index: {1}]
  %5 = xla_tuple %s3, %s4
  %s6 = sld [smem:[#allocation0]]
  $region61: #{tpu_custom_call.1} parent=0
    _
  %s8 = ssub.s32 1, %s6
  %s9 = scalar_select 0, %s8, %s6
  $region1: #{tpu_custom_call.1} parent=0
    #allocation2 [shape = 'u8[4096]{0}', space=vmem, size = 0x1000, scoped, tag = 'input window, operand 0']
    #allocation3 [shape = 's32[2]{0}', space=sflag, size = 0x8, scoped, tag = 'scoped memory for tpu_custom_call.1']
    #allocation4 [shape = 's32[2]{0}', space=sflag, size = 0x8, scoped, tag = 'scoped memory for tpu_custom_call.1']
    #allocation5 [shape = 'u8[32768]{0}', space=vmem, size = 0x8000, scoped, tag = 'input window, operand 1, single buffered']
    #allocation6 [shape = 's32[1]{0}', space=sflag, size = 0x4, scoped, tag = 'scoped memory for tpu_custom_call.1']
    #allocation7 [shape = 'u8[12288]{0}', space=vmem, size = 0x3000, scoped, tag = 'output window, operand 0']
    #allocation8 [shape = 'u8[8192]{0}', space=vmem, size = 0x2000, scoped, tag = 'output window, operand 1']
    #allocation9 [shape = 's32[2]{0}', space=sflag, size = 0x8, scoped, tag = 'scoped memory for tpu_custom_call.1']
    %10 = vsyncpa [#allocation3], 0
    %s11 = scalar_lea.sflag [#allocation3], 1
    %12 = vsyncpa %s11, 0
    %13 = vsyncpa [#allocation6], 0
    %14 = vsyncpa [#allocation4], 0
    %s15 = scalar_lea.sflag [#allocation4], 1
    %16 = vsyncpa %s15, 0
    %17 = vsyncpa [#allocation9], 0
    %s18 = scalar_lea.sflag [#allocation9], 1
    %19 = vsyncpa %s18, 0
    loop: start=0, step=1, limit=4
    $region2: #{tpu_custom_call.1} parent=1 // loop_pre_header
      _
    $region3: #{tpu_custom_call.1} parent=1 // loop_header
      %s21 = sphi 0, %s25
      %p22 = scmp.ge.s32.totalorder %s21, 4
      %s31 = sphi 0, %s33
      %s34 = sphi 0, %s31
      %s35 = sphi 0, %s34
      %s51 = sphi 0, %s35
      %s55 = sphi 0, %s55
      %s57 = sphi 0, %s55
      %s58 = sphi 0, %s57
      %s72 = sphi 0, %s58
      %s76 = sphi 0, %s76
      %s78 = sphi 0, %s76
      %s79 = sphi 0, %s78
      %s93 = sphi 0, %s79
      %s99 = sphi 0, %s101
      %s102 = sphi 0, %s99
      %s103 = sphi 0, %s102
      %s119 = sphi 0, %s103
      %s125 = sphi 0, %s127
      %s128 = sphi 0, %s125
      %s129 = sphi 0, %s128
      %s145 = sphi 0, %s129
    $region4: #{tpu_custom_call.1} parent=1 // loop_header_branch
      %24 = sbr.rel (%p22) target = $region8
    $region5: #{tpu_custom_call.1} parent=1 // loop_body
      %s26 = ssub.s32 %s21, 1
      %s27 = ssub.s32 %s21, 2
      %s28 = sadd.s32 %s21, 1
      %s29 = ssub.s32 %s21, %s28
      %p30 = scmp.eq.s32.totalorder %s29, 0
      %s32 = sadd.s32 %s31, 1
      %s33 = scalar_select %p30, %s31, %s32
      %p36 = pneg %p30
      %p37 = scmp.eq.s32.totalorder %s21, 1
      %p38 = por %p36, %p37
      %p39 = scmp.ne.s32.totalorder %s31, %s34
      %p40 = scmp.eq.s32.totalorder %s21, 0
      %p41 = por %p39, %p40
      %p42 = scmp.ne.s32.totalorder %s31, %s34
      %p43 = scmp.eq.s32.totalorder %s26, 1
      %p44 = por %p42, %p43
      %p45 = scmp.ne.s32.totalorder %s34, %s35
      %p46 = scmp.eq.s32.totalorder %s26, 0
      %p47 = por %p45, %p46
      %p48 = scmp.ne.s32.totalorder %s34, %s35
      %p49 = scmp.eq.s32.totalorder %s27, 1
      %p50 = por %p48, %p49
      %p52 = scmp.ne.s32.totalorder %s35, %s51
      %p53 = scmp.eq.s32.totalorder %s27, 0
      %p54 = por %p52, %p53
      %s56 = sadd.s32 %s55, 1
      %p59 = scmp.eq.s32.totalorder %s21, 1
      %p60 = scmp.ne.s32.totalorder %s55, %s57
      %p61 = scmp.eq.s32.totalorder %s21, 0
      %p62 = por %p60, %p61
      %p63 = scmp.ne.s32.totalorder %s55, %s57
      %p64 = scmp.eq.s32.totalorder %s26, 1
      %p65 = por %p63, %p64
      %p66 = scmp.ne.s32.totalorder %s57, %s58
      %p67 = scmp.eq.s32.totalorder %s26, 0
      %p68 = por %p66, %p67
      %p69 = scmp.ne.s32.totalorder %s57, %s58
      %p70 = scmp.eq.s32.totalorder %s27, 1
      %p71 = por %p69, %p70
      %p73 = scmp.ne.s32.totalorder %s58, %s72
      %p74 = scmp.eq.s32.totalorder %s27, 0
      %p75 = por %p73, %p74
      %s77 = sadd.s32 %s76, 1
      %p80 = scmp.eq.s32.totalorder %s21, 1
      %p81 = scmp.ne.s32.totalorder %s76, %s78
      %p82 = scmp.eq.s32.totalorder %s21, 0
      %p83 = por %p81, %p82
      %p84 = scmp.ne.s32.totalorder %s76, %s78
      %p85 = scmp.eq.s32.totalorder %s26, 1
      %p86 = por %p84, %p85
      %p87 = scmp.ne.s32.totalorder %s78, %s79
      %p88 = scmp.eq.s32.totalorder %s26, 0
      %p89 = por %p87, %p88
      %p90 = scmp.ne.s32.totalorder %s78, %s79
      %p91 = scmp.eq.s32.totalorder %s27, 1
      %p92 = por %p90, %p91
      %p94 = scmp.ne.s32.totalorder %s79, %s93
      %p95 = scmp.eq.s32.totalorder %s27, 0
      %p96 = por %p94, %p95
      %s97 = ssub.s32 %s21, %s28
      %p98 = scmp.eq.s32.totalorder %s97, 0
      %s100 = sadd.s32 %s99, 1
      %s101 = scalar_select %p98, %s99, %s100
      %p104 = pneg %p98
      %p105 = scmp.eq.s32.totalorder %s21, 1
      %p106 = por %p104, %p105
      %p107 = scmp.ne.s32.totalorder %s99, %s102
      %p108 = scmp.eq.s32.totalorder %s21, 0
      %p109 = por %p107, %p108
      %p110 = scmp.ne.s32.totalorder %s99, %s102
      %p111 = scmp.eq.s32.totalorder %s26, 1
      %p112 = por %p110, %p111
      %p113 = scmp.ne.s32.totalorder %s102, %s103
      %p114 = scmp.eq.s32.totalorder %s26, 0
      %p115 = por %p113, %p114
      %p116 = scmp.ne.s32.totalorder %s102, %s103
      %p117 = scmp.eq.s32.totalorder %s27, 1
      %p118 = por %p116, %p117
      %p120 = scmp.ne.s32.totalorder %s103, %s119
      %p121 = scmp.eq.s32.totalorder %s27, 0
      %p122 = por %p120, %p121
      %s123 = ssub.s32 %s21, %s28
      %p124 = scmp.eq.s32.totalorder %s123, 0
      %s126 = sadd.s32 %s125, 1
      %s127 = scalar_select %p124, %s125, %s126
      %p130 = pneg %p124
      %p131 = scmp.eq.s32.totalorder %s21, 1
      %p132 = por %p130, %p131
      %p133 = scmp.ne.s32.totalorder %s125, %s128
      %p134 = scmp.eq.s32.totalorder %s21, 0
      %p135 = por %p133, %p134
      %p136 = scmp.ne.s32.totalorder %s125, %s128
      %p137 = scmp.eq.s32.totalorder %s26, 1
      %p138 = por %p136, %p137
      %p139 = scmp.ne.s32.totalorder %s128, %s129
      %p140 = scmp.eq.s32.totalorder %s26, 0
      %p141 = por %p139, %p140
      %p142 = scmp.ne.s32.totalorder %s128, %s129
      %p143 = scmp.eq.s32.totalorder %s27, 1
      %p144 = por %p142, %p143
      %p146 = scmp.ne.s32.totalorder %s129, %s145
      %p147 = scmp.eq.s32.totalorder %s27, 0
      %p148 = por %p146, %p147
      %p149 = scmp.le.s32.totalorder 1, %s21
      %p150 = scmp.lt.s32.totalorder %s21, 3
      %p151 = pnand %p149, %p150
      %p152 = pneg %p151
      // Predicated region
      $region9: #{tpu_custom_call.1} parent=5 // pred_check
        _
      $region10: #{tpu_custom_call.1} parent=5 // pred_check_branch
        %154 = sbr.rel (%p151) target = $region12
      $region11: #{tpu_custom_call.1} parent=5 // pred_region
        %s155 = ssub.s32 %s21, 1
        // Predicated region
        $region13: #{tpu_custom_call.1} parent=11 // pred_check
          %p156 = pneg %p68
        $region14: #{tpu_custom_call.1} parent=11 // pred_check_branch
          %158 = sbr.rel (%p156) target = $region16
        $region15: #{tpu_custom_call.1} parent=11 // pred_region
          %s160 = ssub.s32 1024, 1024
          %161 = vsyncadd [#allocation6], %s160
          %s162 = sshll.u32 [#allocation5], 4
          %s163 = int_to_ptr.vmem [resolvable:$true] %s162
          %168 = dma.hbm_to_vmem [thread:$0]  %s1, 1024, %s163, [#allocation6], 256, 256, 16
        $region16: #{tpu_custom_call.1} parent=11 // pred_fallthru
          _
        // Predicated region
        $region17: #{tpu_custom_call.1} parent=11 // pred_check
          %p169 = pneg %p89
        $region18: #{tpu_custom_call.1} parent=11 // pred_check_branch
          %171 = sbr.rel (%p169) target = $region20
        $region19: #{tpu_custom_call.1} parent=11 // pred_region
          _
        $region20: #{tpu_custom_call.1} parent=11 // pred_fallthru
          _
      $region12: #{tpu_custom_call.1} parent=5 // pred_fallthru
        _
      %p172 = scmp.lt.s32.totalorder %s21, 2
      // Predicated region
      $region21: #{tpu_custom_call.1} parent=5 // pred_check
        %p173 = pneg %p172
      $region22: #{tpu_custom_call.1} parent=5 // pred_check_branch
        %175 = sbr.rel (%p173) target = $region24
      $region23: #{tpu_custom_call.1} parent=5 // pred_region
        // Predicated region
        $region25: #{tpu_custom_call.1} parent=23 // pred_check
          %p176 = pneg %p41
        $region26: #{tpu_custom_call.1} parent=23 // pred_check_branch
          %178 = sbr.rel (%p176) target = $region28
        $region27: #{tpu_custom_call.1} parent=23 // pred_region
          %s179 = sand.u32 %s31, 1
          %s180 = scalar_lea.sflag [#allocation3], %s179
          %s181 = sand.u32 %s31, 1
          %s182 = smul.addr %s181, 4
          %s183 = scalar_lea.vmem [#allocation2], %s182
          %s185 = ssub.s32 64, 64
          %186 = vsyncadd %s180, %s185
          %s187 = smul.addr %s21, 64
          %s188 = scalar_lea.hbm %s0, %s187
          %s190 = sshll.u32 %s183, 4
          %s191 = int_to_ptr.vmem [resolvable:$true] %s190
          %193 = dma.hbm_to_vmem [thread:$0]  %s188, 64, %s191, %s180
        $region28: #{tpu_custom_call.1} parent=23 // pred_fallthru
          _
      $region24: #{tpu_custom_call.1} parent=5 // pred_fallthru
        _
      %p194 = scmp.le.s32.totalorder 1, %s21
      %p195 = scmp.lt.s32.totalorder %s21, 3
      %p196 = pnand %p194, %p195
      %p197 = pneg %p196
      // Predicated region
      $region29: #{tpu_custom_call.1} parent=5 // pred_check
        _
      $region30: #{tpu_custom_call.1} parent=5 // pred_check_branch
        %199 = sbr.rel (%p196) target = $region32
      $region31: #{tpu_custom_call.1} parent=5 // pred_region
        %s200 = ssub.s32 %s21, 1
        %s201 = sand.u32 %s34, 1
        %s202 = scalar_lea.sflag [#allocation3], %s201
        %s203 = sand.u32 %s34, 1
        %s204 = smul.addr %s203, 4
        %s205 = scalar_lea.vmem [#allocation2], %s204
        // Predicated region
        $region33: #{tpu_custom_call.1} parent=31 // pred_check
          %p206 = pneg %p47
        $region34: #{tpu_custom_call.1} parent=31 // pred_check_branch
          %208 = sbr.rel (%p206) target = $region36
        $region35: #{tpu_custom_call.1} parent=31 // pred_region
          %209 = dma.done %s202, 64
        $region36: #{tpu_custom_call.1} parent=31 // pred_fallthru
          _
        // Predicated region
        $region37: #{tpu_custom_call.1} parent=31 // pred_check
          %p210 = pneg %p68
        $region38: #{tpu_custom_call.1} parent=31 // pred_check_branch
          %212 = sbr.rel (%p210) target = $region40
        $region39: #{tpu_custom_call.1} parent=31 // pred_region
          %213 = dma.done [#allocation6], 1024
        $region40: #{tpu_custom_call.1} parent=31 // pred_fallthru
          _
        %s214 = sand.u32 %s34, 1
        %s215 = scalar_lea.sflag [#allocation3], %s214
        %s216 = sand.u32 %s34, 1
        %s217 = smul.addr %s216, 4
        %s218 = scalar_lea.vmem [#allocation2], %s217
        %p219 = pneg %p47
        %p220 = pneg %p44
        %p221 = pneg %p68
        %p222 = pneg %p65
        %p223 = pneg %p89
        %p224 = pneg %p86
        %p225 = pneg %p115
        %p226 = pneg %p112
        %s227 = sand.u32 %s102, 1
        %s228 = scalar_lea.sflag [#allocation4], %s227
        %s229 = sand.u32 %s102, 1
        %s230 = smul.addr %s229, 12
        %s231 = scalar_lea.vmem [#allocation7], %s230
        %p232 = pneg %p141
        %p233 = pneg %p138
        %s234 = sand.u32 %s128, 1
        %s235 = scalar_lea.sflag [#allocation9], %s234
        %s236 = sand.u32 %s128, 1
        %s237 = smul.addr %s236, 8
        %s238 = scalar_lea.vmem [#allocation8], %s237
        %v240 = vld [vmem:[%s205] sm:$0xf]
        %v241 = vld [vmem:[#allocation5] sm:$0xff]
        %v242 = vld [vmem:[#allocation5 + $0x8] sm:$0xff]
        %v243 = vld [vmem:[#allocation5 + $0x10] sm:$0xff]
        %v244 = vld [vmem:[#allocation5 + $0x18] sm:$0xff]
        %v245 = vld [vmem:[#allocation5 + $0x20] sm:$0xff]
        %v246 = vld [vmem:[#allocation5 + $0x28] sm:$0xff]
        %v247 = vld [vmem:[#allocation5 + $0x30] sm:$0xff]
        %v248 = vld [vmem:[#allocation5 + $0x38] sm:$0xff]
        %v249 = vld [vmem:[%s2] sm:$0xf]
        %v251 = vlaneseq
        %v252 = vshrl.u32 %v251, 7
        %v253 = vsub.s32 0, %v252
        %v254 = vrot.slane %v249, %v253
        %v255 = vlaneseq
        %v256 = vshrl.u32 %v255, 7
        %v257 = vsub.s32 1, %v256
        %v258 = vrot.slane %v249, %v257
        %v259 = vlaneseq
        %v260 = vshrl.u32 %v259, 7
        %v261 = vsub.s32 2, %v260
        %v262 = vrot.slane %v249, %v261
        %v263 = vlaneseq
        %v264 = vshrl.u32 %v263, 7
        %v265 = vsub.s32 3, %v264
        %v266 = vrot.slane %v249, %v265
        %v279 = vunpack.c.l.b16 %v241
        %v280 = vunpack.c.h.b16 %v241
        %v281 = vunpack.c.l.b16 %v242
        %v282 = vunpack.c.h.b16 %v242
        %v283 = vunpack.c.l.b16 %v243
        %v284 = vunpack.c.h.b16 %v243
        %v285 = vunpack.c.l.b16 %v244
        %v286 = vunpack.c.h.b16 %v244
        %v287 = vunpack.c.l.b16 %v245
        %v288 = vunpack.c.h.b16 %v245
        %v289 = vunpack.c.l.b16 %v246
        %v290 = vunpack.c.h.b16 %v246
        %v291 = vunpack.c.l.b16 %v247
        %v292 = vunpack.c.h.b16 %v247
        %v293 = vunpack.c.l.b16 %v248
        %v294 = vunpack.c.h.b16 %v248
        %v295 = vpack.c.b16 %v283, %v279
        %v296 = vpack.c.b16 %v284, %v280
        %v297 = vpack.c.b16 %v285, %v281
        %v298 = vpack.c.b16 %v286, %v282
        %v299 = vpack.c.b16 %v291, %v287
        %v300 = vpack.c.b16 %v292, %v288
        %v301 = vpack.c.b16 %v293, %v289
        %v302 = vpack.c.b16 %v294, %v290
        %vm311 = vcmask 261120
        %v313 = vsel %vm311, %v240, 0
        %315 = vmatprep.subr.bf16.mxu0 %v296
        %316 = vmatpush1.bf16.msra.mxu0 %v295
        %317 = vmatprep.subr.bf16.mxu0 %v300
        %318 = vmatpush1.bf16.msra.mxu0 %v299
        %319 = vmatprep.subr.bf16.mxu0 0
        %320 = vmatpush1.bf16.msra.mxu0 0
        %321 = vmatprep.subr.bf16.mxu0 0
        %322 = vmatpush1.bf16.msra.mxu0 0
        %323 = vmatprep.subr.bf16.mxu0 0
        %324 = vmatpush1.bf16.msra.mxu0 0
        %325 = vmatprep.subr.bf16.mxu0 0
        %326 = vmatpush1.bf16.msra.mxu0 0
        %327 = vmatprep.subr.bf16.mxu0 0
        %328 = vmatpush1.bf16.msra.mxu0 0
        %329 = vmatprep.subr.bf16.mxu0 0
        %330 = vmatpush1.bf16.msra.mxu0 0
        %331 = vmatprep.subr.bf16.mxu0 0
        %332 = vmatpush1.bf16.msra.mxu0 0
        %333 = vmatprep.subr.bf16.mxu0 0
        %334 = vmatpush1.bf16.msra.mxu0 0
        %335 = vmatprep.subr.bf16.mxu0 0
        %336 = vmatpush1.bf16.msra.mxu0 0
        %337 = vmatprep.subr.bf16.mxu0 0
        %338 = vmatpush1.bf16.msra.mxu0 0
        %339 = vmatprep.subr.bf16.mxu0 0
        %340 = vmatpush1.bf16.msra.mxu0 0
        %341 = vmatprep.subr.bf16.mxu0 0
        %342 = vmatpush1.bf16.msra.mxu0 0
        %343 = vmatprep.subr.bf16.mxu0 0
        %344 = vmatpush1.bf16.msra.mxu0 0
        %345 = vmatprep.subr.bf16.mxu0 0
        %346 = vmatpush1.bf16.msra.mxu0 0
        %347 = vmatprep.mubr.bf16.mxu0 0
        %348 = vmatmul.mubr.bf16.gmra.mrb[0].mxu0 %v313
        %v349 = vpop.f32.mrb[0].mxu0
        %v350 = vadd.f32 %v254, %v349
        %v351 = vpop.f32.mrb[0].mxu0
        %v352 = vadd.f32 %v258, %v351
        %v353 = vpop.f32.mrb[0].mxu0
        %v354 = vpop.f32.mrb[0].mxu0
        %355 = vdwg.mxu0
        %356 = vmatprep.subr.bf16.mxu0 %v298
        %357 = vmatpush1.bf16.msra.mxu0 %v297
        %358 = vmatprep.subr.bf16.mxu0 %v302
        %359 = vmatpush1.bf16.msra.mxu0 %v301
        %360 = vmatprep.subr.bf16.mxu0 0
        %361 = vmatpush1.bf16.msra.mxu0 0
        %362 = vmatprep.subr.bf16.mxu0 0
        %363 = vmatpush1.bf16.msra.mxu0 0
        %364 = vmatprep.subr.bf16.mxu0 0
        %365 = vmatpush1.bf16.msra.mxu0 0
        %366 = vmatprep.subr.bf16.mxu0 0
        %367 = vmatpush1.bf16.msra.mxu0 0
        %368 = vmatprep.subr.bf16.mxu0 0
        %369 = vmatpush1.bf16.msra.mxu0 0
        %370 = vmatprep.subr.bf16.mxu0 0
        %371 = vmatpush1.bf16.msra.mxu0 0
        %372 = vmatprep.subr.bf16.mxu0 0
        %373 = vmatpush1.bf16.msra.mxu0 0
        %374 = vmatprep.subr.bf16.mxu0 0
        %375 = vmatpush1.bf16.msra.mxu0 0
        %376 = vmatprep.subr.bf16.mxu0 0
        %377 = vmatpush1.bf16.msra.mxu0 0
        %378 = vmatprep.subr.bf16.mxu0 0
        %379 = vmatpush1.bf16.msra.mxu0 0
        %380 = vmatprep.subr.bf16.mxu0 0
        %381 = vmatpush1.bf16.msra.mxu0 0
        %382 = vmatprep.subr.bf16.mxu0 0
        %383 = vmatpush1.bf16.msra.mxu0 0
        %384 = vmatprep.subr.bf16.mxu0 0
        %385 = vmatpush1.bf16.msra.mxu0 0
        %386 = vmatprep.subr.bf16.mxu0 0
        %387 = vmatpush1.bf16.msra.mxu0 0
        %388 = vmatprep.mubr.bf16.mxu0 0
        %389 = vmatmul.mubr.bf16.gmra.mrb[0].mxu0 %v313
        %v390 = vpop.f32.mrb[0].mxu0
        %v391 = vadd.f32 %v262, %v390
        %v392 = vpop.f32.mrb[0].mxu0
        %v393 = vadd.f32 %v266, %v392
        %v394 = vpop.f32.mrb[0].mxu0
        %v395 = vpop.f32.mrb[0].mxu0
        %396 = vdwg.mxu0
        %v397 = vpack.c.bf16 %v350, %v350
        %v398 = vpack.c.bf16 %v352, %v352
        %v401 = vunpack.c.l.b16 %v397
        %v402 = vunpack.c.l.b16 %v398
        %v403 = vpack.c.b16 %v402, %v401
        %405 = vst [vmem:[%s231] sm:$0xff] %v403
        %v406 = vxor.u32 %v391, 2147483648
        %v407 = vmul.f32 %v406, 1.442695
        %v408 = vpow.pop %v407
        %v409 = vadd.f32 %v408, 1.0
        %v410 = vrcp.pop %v409
        %v411 = vmul.f32 1.0, %v410
        %v412 = vsub.f32 %v350, %v352
        %v413 = vmul.f32 %v411, %v412
        %v414 = vadd.f32 %v352, %v413
        %v415 = vpack.c.bf16 %v414, %v414
        %416 = vst [vmem:[%s231 + $0x8] sm:$0xf] %v415
        %v417 = vxor.u32 %v393, 2147483648
        %v418 = vmul.f32 %v417, 1.442695
        %v419 = vpow.pop %v418
        %v420 = vadd.f32 %v419, 1.0
        %v421 = vrcp.pop %v420
        %v422 = vmul.f32 1.0, %v421
        %423 = vst [vmem:[%s238] sm:$0xff] %v422
        %s424 = sand.u32 %s102, 1
        %s425 = scalar_lea.sflag [#allocation4], %s424
        %s426 = sand.u32 %s102, 1
        %s427 = smul.addr %s426, 12
        %s428 = scalar_lea.vmem [#allocation7], %s427
        %s429 = sand.u32 %s128, 1
        %s430 = scalar_lea.sflag [#allocation9], %s429
        %s431 = sand.u32 %s128, 1
        %s432 = smul.addr %s431, 8
        %s433 = scalar_lea.vmem [#allocation8], %s432
        // Predicated region
        $region41: #{tpu_custom_call.1} parent=31 // pred_check
          %p434 = pneg %p112
        $region42: #{tpu_custom_call.1} parent=31 // pred_check_branch
          %436 = sbr.rel (%p434) target = $region44
        $region43: #{tpu_custom_call.1} parent=31 // pred_region
          %s438 = ssub.s32 192, 192
          %439 = vsyncadd %s425, %s438
          %s440 = smul.addr %s26, 3
          %s441 = smul.addr %s440, 64
          %s442 = scalar_lea.hbm %s3, %s441
          %s444 = sshll.u32 %s428, 4
          %s445 = int_to_ptr.vmem [resolvable:$true] %s444
          %447 = dma.vmem_to_hbm [thread:$0]  %s445, 192, %s442, %s425
        $region44: #{tpu_custom_call.1} parent=31 // pred_fallthru
          _
        // Predicated region
        $region45: #{tpu_custom_call.1} parent=31 // pred_check
          %p448 = pneg %p138
        $region46: #{tpu_custom_call.1} parent=31 // pred_check_branch
          %450 = sbr.rel (%p448) target = $region48
        $region47: #{tpu_custom_call.1} parent=31 // pred_region
          %s452 = ssub.s32 128, 128
          %453 = vsyncadd %s430, %s452
          %s454 = smul.addr %s26, 128
          %s455 = scalar_lea.hbm %s4, %s454
          %s457 = sshll.u32 %s433, 4
          %s458 = int_to_ptr.vmem [resolvable:$true] %s457
          %460 = dma.vmem_to_hbm [thread:$0]  %s458, 128, %s455, %s430
        $region48: #{tpu_custom_call.1} parent=31 // pred_fallthru
          _
      $region32: #{tpu_custom_call.1} parent=5 // pred_fallthru
        _
      %p461 = scmp.le.s32.totalorder 2, %s21
      // Predicated region
      $region49: #{tpu_custom_call.1} parent=5 // pred_check
        %p462 = pneg %p461
      $region50: #{tpu_custom_call.1} parent=5 // pred_check_branch
        %464 = sbr.rel (%p462) target = $region52
      $region51: #{tpu_custom_call.1} parent=5 // pred_region
        %s465 = ssub.s32 %s21, 2
        // Predicated region
        $region53: #{tpu_custom_call.1} parent=51 // pred_check
          %p466 = pneg %p118
        $region54: #{tpu_custom_call.1} parent=51 // pred_check_branch
          %468 = sbr.rel (%p466) target = $region56
        $region55: #{tpu_custom_call.1} parent=51 // pred_region
          %s469 = sand.u32 %s103, 1
          %s470 = scalar_lea.sflag [#allocation4], %s469
          %s471 = sand.u32 %s103, 1
          %s472 = smul.addr %s471, 12
          %s473 = scalar_lea.vmem [#allocation7], %s472
          %474 = dma.done %s470, 192
        $region56: #{tpu_custom_call.1} parent=51 // pred_fallthru
          _
        // Predicated region
        $region57: #{tpu_custom_call.1} parent=51 // pred_check
          %p475 = pneg %p144
        $region58: #{tpu_custom_call.1} parent=51 // pred_check_branch
          %477 = sbr.rel (%p475) target = $region60
        $region59: #{tpu_custom_call.1} parent=51 // pred_region
          %s478 = sand.u32 %s129, 1
          %s479 = scalar_lea.sflag [#allocation9], %s478
          %s480 = sand.u32 %s129, 1
          %s481 = smul.addr %s480, 8
          %s482 = scalar_lea.vmem [#allocation8], %s481
          %483 = dma.done %s479, 128
        $region60: #{tpu_custom_call.1} parent=51 // pred_fallthru
          _
      $region52: #{tpu_custom_call.1} parent=5 // pred_fallthru
        _
    $region6: #{tpu_custom_call.1} parent=1 // loop_footer
      %s25 = sadd.s32 1, %s21
    $region7: #{tpu_custom_call.1} parent=1 // loop_footer_branch
      %20 = sbr.rel target = $region3
    $region8: #{tpu_custom_call.1} parent=1 // loop_exit
      _
    %484 = vsyncpa [#allocation3], 1
    %s485 = scalar_lea.sflag [#allocation3], 1
    %486 = vsyncpa %s485, 1
    %487 = vsyncpa [#allocation6], 1
    %488 = vsyncpa [#allocation4], 1
    %s489 = scalar_lea.sflag [#allocation4], 1
    %490 = vsyncpa %s489, 1
    %491 = vsyncpa [#allocation9], 1
    %s492 = scalar_lea.sflag [#allocation9], 1
    %493 = vsyncpa %s492, 1

</llo_original>
